<compile_context>
chip_gen: v7x
topology: tpu7x:2x2x1
jax: 0.10.0
libtpu: 0.0.40
codegen_flags: <defaults>
</compile_context>

<pallas_src>
import jax
import jax.numpy as jnp
from jax.experimental import pallas as pl
from jax.experimental.pallas import tpu as pltpu


# ---------------------------------------------------------------------------
# Tiling helpers
# ---------------------------------------------------------------------------
def _pick_tile(dim, pref, base):
    """Largest tile <= pref that is a multiple of `base` and divides `dim`,
    falling back to the full dim (a full-extent block is always legal)."""
    if dim <= pref:
        return dim
    t = (pref // base) * base
    while t >= base:
        if dim % t == 0:
            return t
        t -= base
    return dim


def _vmem_capacity_bytes():
    """Physical VMEM of the current generation (64 MiB v7x, 128 MiB v5e/v6e)."""
    cap = 128 * 1024 * 1024
    try:
        info = pltpu.get_tpu_info()
        cap = int(getattr(info, "vmem_capacity_bytes", cap))
    except Exception:
        pass
    return cap


def _cls_tile_m(M, pref=256):
    tm = _pick_tile(M, pref, 8)
    # Expose >= 2 blocks on the parallel axis when cheap (v7x megacore).
    if M // tm < 2:
        half = _pick_tile(M, max(8, M // 2), 8)
        if half < M and M % half == 0:
            tm = half
    return tm


def _avg_tiles_and_vmem(B, S, H, n_inputs):
    """Generation-aware (tb, th, vmem_limit) for the masked-average kernels."""
    cap = _vmem_capacity_bytes()
    budget = int(cap * 0.6)
    tb = _pick_tile(B, 8, 8)
    # Double-buffered pipeline cost model:
    #   mask  : 2 * tb * S * 128 * 4   ([tb, S, 1] lane-pads 1 -> 128 in VMEM)
    #   input : 2 * n_inputs * tb * S * th * 4
    #   output: 2 * tb * th * 4
    fixed = 2 * tb * S * 128 * 4
    per_th = 2 * n_inputs * tb * S * 4 + 2 * tb * 4
    th_budget = max(128, ((max(budget - fixed, per_th * 128)) // per_th) // 128 * 128)
    th = _pick_tile(H, min(th_budget, H), 128)
    # Expose >= 2 blocks total so both v7x TensorCores get work when possible.
    if (B // tb) * (H // th) < 2:
        half = _pick_tile(H, max(128, H // 2), 128)
        if half < H and H % half == 0:
            th = half
    est = fixed + per_th * th
    vmem_limit = min(int(cap * 0.9), max(budget, est + (8 << 20)))
    return tb, th, vmem_limit


# ---------------------------------------------------------------------------
# 'cls' pooler: y = tanh(x @ W + b), x = CLS-token rows [B, H] (bf16)
# Single grid axis over M; W and bias are resident (constant index_map), the
# whole K reduction happens inside one jnp.dot, bias + tanh fused in epilogue.
# ---------------------------------------------------------------------------
def _cls_dense_tanh_kernel(x_ref, w_ref, b_ref, o_ref):
    acc = jnp.dot(x_ref[...], w_ref[...], preferred_element_type=jnp.float32)
    o_ref[...] = jnp.tanh(acc + b_ref[...]).astype(o_ref.dtype)


def cls_pool(last_hidden, w_bf16, b):
    x = last_hidden[:, 0, :].astype(jnp.bfloat16)   # CLS rows, bf16 (half the DMA)
    M, K = x.shape
    K2, N = w_bf16.shape
    assert K == K2
    tm = _cls_tile_m(M)
    cap = _vmem_capacity_bytes()
    return pl.pallas_call(
        _cls_dense_tanh_kernel,
        out_shape=jax.ShapeDtypeStruct((M, N), jnp.float32),
        grid_spec=pltpu.PrefetchScalarGridSpec(
            num_scalar_prefetch=0,
            grid=(M // tm,),
            in_specs=[
                pl.BlockSpec((tm, K), lambda i: (i, 0)),   # x rows (bf16)
                pl.BlockSpec((K, N), lambda i: (0, 0)),    # W resident (bf16)
                pl.BlockSpec((1, N), lambda i: (0, 0)),    # bias resident (f32)
            ],
            out_specs=pl.BlockSpec((tm, N), lambda i: (i, 0)),
        ),
        compiler_params=pltpu.CompilerParams(
            dimension_semantics=("parallel",),
            vmem_limit_bytes=int(cap * 0.6)),
        cost_estimate=pl.CostEstimate(
            flops=2 * M * K * N,
            transcendentals=M * N,
            bytes_accessed=M * K * 2 + K * N * 2 + N * 4 + M * N * 4),
    )(x, w_bf16, b)


# ---------------------------------------------------------------------------
# 'avg' pooler.  Mask already pre-scaled by 1/(sum+1e-8) in the wrapper, so the
# kernel is just a masked sum over the sequence axis: pure mem-bound VPU work.
# ---------------------------------------------------------------------------
def _masked_avg_kernel(x_ref, m_ref, o_ref):
    o_ref[...] = jnp.sum(x_ref[...] * m_ref[...], axis=1)


def _scaled_mask(mask):
    m = mask.astype(jnp.float32)
    den = jnp.sum(m, axis=1, keepdims=True) + 1e-8
    return (m / den)[:, :, None]                     # [B, S, 1]


def masked_avg_pool(hidden, mask):
    B, S, H = hidden.shape
    tb, th, vmem_limit = _avg_tiles_and_vmem(B, S, H, n_inputs=1)
    m3 = _scaled_mask(mask)
    return pl.pallas_call(
        _masked_avg_kernel,
        out_shape=jax.ShapeDtypeStruct((B, H), jnp.float32),
        grid_spec=pltpu.PrefetchScalarGridSpec(
            num_scalar_prefetch=0,
            grid=(B // tb, H // th),
            in_specs=[
                pl.BlockSpec((tb, S, th), lambda i, j: (i, 0, j)),
                pl.BlockSpec((tb, S, 1), lambda i, j: (i, 0, 0)),
            ],
            out_specs=pl.BlockSpec((tb, th), lambda i, j: (i, j)),
        ),
        compiler_params=pltpu.CompilerParams(
            dimension_semantics=("parallel", "parallel"),
            vmem_limit_bytes=vmem_limit),
        cost_estimate=pl.CostEstimate(
            flops=2 * B * S * H,
            transcendentals=0,
            bytes_accessed=B * S * H * 4 + B * S * 4 + B * H * 4),
    )(hidden, m3)


# ---------------------------------------------------------------------------
# 'avg_top2' / 'avg_first_last': fused masked mean of two hidden-state layers
# (reads the pre-scaled mask once, one launch instead of two + an XLA add).
# ---------------------------------------------------------------------------
def _masked_avg2_kernel(xa_ref, xb_ref, m_ref, o_ref):
    m = m_ref[...]                                   # [tb, S, 1] pre-scaled
    sa = jnp.sum(xa_ref[...] * m, axis=1)
    sb = jnp.sum(xb_ref[...] * m, axis=1)
    o_ref[...] = 0.5 * (sa + sb)


def masked_avg_pool2(hidden_a, hidden_b, mask):
    B, S, H = hidden_a.shape
    tb, th, vmem_limit = _avg_tiles_and_vmem(B, S, H, n_inputs=2)
    m3 = _scaled_mask(mask)
    return pl.pallas_call(
        _masked_avg2_kernel,
        out_shape=jax.ShapeDtypeStruct((B, H), jnp.float32),
        grid_spec=pltpu.PrefetchScalarGridSpec(
            num_scalar_prefetch=0,
            grid=(B // tb, H // th),
            in_specs=[
                pl.BlockSpec((tb, S, th), lambda i, j: (i, 0, j)),
                pl.BlockSpec((tb, S, th), lambda i, j: (i, 0, j)),
                pl.BlockSpec((tb, S, 1), lambda i, j: (i, 0, 0)),
            ],
            out_specs=pl.BlockSpec((tb, th), lambda i, j: (i, j)),
        ),
        compiler_params=pltpu.CompilerParams(
            dimension_semantics=("parallel", "parallel"),
            vmem_limit_bytes=vmem_limit),
        cost_estimate=pl.CostEstimate(
            flops=4 * B * S * H + B * H,
            transcendentals=0,
            bytes_accessed=2 * B * S * H * 4 + B * S * 4 + B * H * 4),
    )(hidden_a, hidden_b, m3)


# ---------------------------------------------------------------------------
# Module-level forward (mirrors SimcsePooler.forward)
#   output[0] = last_hidden_state [B, S, H]
#   output[2] = tuple of all hidden states (embeddings + each layer)
# ---------------------------------------------------------------------------
def simcse_pooler(output, attention_mask, params, *, pooler_type):
    if pooler_type == "cls":
        return cls_pool(output[0], params["dense_w"], params["dense_b"])
    if pooler_type == "cls_before_pooler":
        # Pure slice with zero compute: layout plumbing, left to XLA on purpose.
        return output[0][:, 0, :]
    if pooler_type == "avg":
        return masked_avg_pool(output[0], attention_mask)
    if pooler_type == "avg_top2":
        return masked_avg_pool2(output[2][-1], output[2][-2], attention_mask)
    if pooler_type == "avg_first_last":
        # Matches the torch module: output[2][1] (first encoder layer) and output[2][-1].
        return masked_avg_pool2(output[2][-1], output[2][1], attention_mask)
    raise ValueError(f"unknown pooler_type: {pooler_type}")


# ---------------------------------------------------------------------------
# Pure-JAX reference (torch semantics; matmul done with the same bf16 weights)
# ---------------------------------------------------------------------------
def simcse_pooler_ref(output, attention_mask, params, *, pooler_type):
    mask = attention_mask.astype(jnp.float32)

    def avg(h):
        num = jnp.sum(h * mask[:, :, None], axis=1)
        den = jnp.sum(mask, axis=1, keepdims=True) + 1e-8
        return num / den

    if pooler_type == "cls":
        x = output[0][:, 0, :]
        h = jnp.dot(x.astype(jnp.bfloat16), params["dense_w"],
                    preferred_element_type=jnp.float32) + params["dense_b"]
        return jnp.tanh(h)
    if pooler_type == "cls_before_pooler":
        return output[0][:, 0, :]
    if pooler_type == "avg":
        return avg(output[0])
    if pooler_type == "avg_top2":
        return 0.5 * (avg(output[2][-1]) + avg(output[2][-2]))
    if pooler_type == "avg_first_last":
        return 0.5 * (avg(output[2][-1]) + avg(output[2][1]))
    raise ValueError(pooler_type)


if __name__ == "__main__":
    B, S, H = 2, 8, 32
    NUM_HIDDEN = 4  # embeddings + 3 layers

    key = jax.random.PRNGKey(0)
    k_hs, k_w = jax.random.split(key, 2)
    hs_keys = jax.random.split(k_hs, NUM_HIDDEN)
    hidden_states = tuple(
        jax.random.normal(k, (B, S, H), jnp.float32) for k in hs_keys)
    # HF-style output tuple: (last_hidden_state, pooled_output, all_hidden_states)
    output = (hidden_states[-1], None, hidden_states)

    lengths = jnp.array([S, S - 3])
    attention_mask = (jnp.arange(S)[None, :] < lengths[:, None]).astype(jnp.float32)

    kw, kb = jax.random.split(k_w)
    params = {
        # [in, out], bf16 (transposed vs torch nn.Linear.weight)
        "dense_w": (0.02 * jax.random.normal(kw, (H, H), jnp.float32)
                    ).astype(jnp.bfloat16),
        "dense_b": 0.02 * jax.random.normal(kb, (1, H), jnp.float32),
    }

    for ptype in ("cls", "cls_before_pooler", "avg", "avg_top2", "avg_first_last"):
        got = jax.block_until_ready(
            simcse_pooler(output, attention_mask, params, pooler_type=ptype))
        want = simcse_pooler_ref(output, attention_mask, params, pooler_type=ptype)
        assert got.shape == (B, H), (ptype, got.shape)
        assert jnp.allclose(got, want, atol=1e-3, rtol=1e-3), ptype

    # Extra sanity: 'cls' against a full-f32 torch-semantics reference
    # (loose tolerance accounts for bf16 MXU inputs).
    x_cls = output[0][:, 0, :]
    f32_ref = jnp.tanh(x_cls @ params["dense_w"].astype(jnp.float32)
                       + params["dense_b"])
    got_cls = simcse_pooler(output, attention_mask, params, pooler_type="cls")
    assert jnp.allclose(got_cls, f32_ref, atol=2e-2, rtol=2e-2)

    print("KERNEL_OK")
</pallas_src>

<mosaic_0001>
module attributes {stable_mosaic.version = 11 : i64} {
  func.func @_cls_dense_tanh_kernel(%arg0: i32, %arg1: memref<2x32xbf16, #tpu.memory_space<vmem>>, %arg2: memref<32x32xbf16, #tpu.memory_space<vmem>>, %arg3: memref<1x32xf32, #tpu.memory_space<vmem>>, %arg4: memref<2x32xf32, #tpu.memory_space<vmem>>) attributes {dimension_semantics = [#tpu.dimension_semantics<parallel>], iteration_bounds = array<i64: 1>, scalar_prefetch = 0 : i64, scratch_operands = 0 : i64, tpu.core_type = #tpu.core_type<tc>, window_params = [{transform_indices = @transform_0, window_bounds = array<i64: 2, 32>}, {pipeline_mode = #tpu.pipeline_mode<synchronous>, transform_indices = @transform_1, window_bounds = array<i64: 32, 32>}, {pipeline_mode = #tpu.pipeline_mode<synchronous>, transform_indices = @transform_2, window_bounds = array<i64: 1, 32>}, {transform_indices = @transform_3, window_bounds = array<i64: 2, 32>}]} {
    %c0 = arith.constant 0 : index
    %c0_0 = arith.constant 0 : index
    %0 = vector.load %arg1[%c0, %c0_0] : memref<2x32xbf16, #tpu.memory_space<vmem>>, vector<2x32xbf16>
    %c0_1 = arith.constant 0 : index
    %c0_2 = arith.constant 0 : index
    %1 = vector.load %arg2[%c0_1, %c0_2] : memref<32x32xbf16, #tpu.memory_space<vmem>>, vector<32x32xbf16>
    %cst = arith.constant dense<0.000000e+00> : vector<2x32xf32>
    %2 = tpu.matmul %0, %1, %cst {dimension_numbers = #tpu.dot_dimension_numbers<[1], [0], [0], [1], [0, 0, 1, 1], [], []>} : vector<2x32xbf16>, vector<32x32xbf16>, vector<2x32xf32> -> vector<2x32xf32>
    %c0_3 = arith.constant 0 : index
    %c0_4 = arith.constant 0 : index
    %3 = vector.load %arg3[%c0_3, %c0_4] : memref<1x32xf32, #tpu.memory_space<vmem>>, vector<1x32xf32>
    %4 = vector.broadcast %3 : vector<1x32xf32> to vector<2x32xf32>
    %5 = arith.addf %2, %4 : vector<2x32xf32>
    %6 = math.tanh %5 : vector<2x32xf32>
    %c0_5 = arith.constant 0 : index
    %c0_6 = arith.constant 0 : index
    %7 = vector.load %arg4[%c0_5, %c0_6] : memref<2x32xf32, #tpu.memory_space<vmem>>, vector<2x32xf32>
    tpu.vector_store %arg4[%c0_5, %c0_6], %6 {strides = array<i32>} : memref<2x32xf32, #tpu.memory_space<vmem>>, vector<2x32xf32>,
    return
  }
  func.func @transform_0(%arg0: i32) -> (i32, i32) {
    %c0_i32 = arith.constant 0 : i32
    %c0_i32_0 = arith.constant 0 : i32
    return %arg0, %c0_i32 : i32, i32
  }
  func.func @transform_1(%arg0: i32) -> (i32, i32) {
    %c0_i32 = arith.constant 0 : i32
    %c0_i32_0 = arith.constant 0 : i32
    %c0_i32_1 = arith.constant 0 : i32
    return %c0_i32, %c0_i32_0 : i32, i32
  }
  func.func @transform_2(%arg0: i32) -> (i32, i32) {
    %c0_i32 = arith.constant 0 : i32
    %c0_i32_0 = arith.constant 0 : i32
    %c0_i32_1 = arith.constant 0 : i32
    return %c0_i32, %c0_i32_0 : i32, i32
  }
  func.func @transform_3(%arg0: i32) -> (i32, i32) {
    %c0_i32 = arith.constant 0 : i32
    %c0_i32_0 = arith.constant 0 : i32
    return %arg0, %c0_i32 : i32, i32
  }
}

</mosaic_0001>

<llo_original>
// kernel: tpu_custom_call.1
$region0: #{tpu_custom_call.1}
  #allocation0 [shape = 'u32[]', space=smem, size = 0x4, offset = 0x4, fixed_abs, tag = 'smem constant byte address 0x4 - core index']
  #allocation1 [shape = 'u32[144,128]{1,0:T(1,128)}', space=vmem, size = 0x12000, scoped, tag = 'internal scratch']
  %s0 = inlined_call_operand.hbm [shape: bf16[2,32], index: 0, kind: input, shape index: {}]
  %s1 = inlined_call_operand.hbm [shape: bf16[32,32], index: 1, kind: input, shape index: {}]
  %s2 = inlined_call_operand.hbm [shape: f32[1,32], index: 2, kind: input, shape index: {}]
  %s3 = inlined_call_operand.hbm [shape: f32[2,32], index: 3, kind: output, shape index: {}]
  %s4 = sld [smem:[#allocation0]]
  $region34: #{tpu_custom_call.1} parent=0
    _
  %s6 = ssub.s32 1, %s4
  %s7 = scalar_select 0, %s6, %s4
  $region1: #{tpu_custom_call.1} parent=0
    #allocation2 [shape = 'u8[512]{0}', space=vmem, size = 0x400, scoped, tag = 'input window, operand 0, single buffered']
    #allocation3 [shape = 's32[1]{0}', space=sflag, size = 0x4, scoped, tag = 'scoped memory for tpu_custom_call.1']
    #allocation4 [shape = 's32[1]{0}', space=sflag, size = 0x4, scoped, tag = 'scoped memory for tpu_custom_call.1']
    #allocation5 [shape = 'u8[8192]{0}', space=vmem, size = 0x2000, scoped, tag = 'input window, operand 1, single buffered']
    #allocation6 [shape = 's32[1]{0}', space=sflag, size = 0x4, scoped, tag = 'scoped memory for tpu_custom_call.1']
    #allocation7 [shape = 'u8[512]{0}', space=vmem, size = 0x400, scoped, tag = 'input window, operand 2, single buffered']
    #allocation8 [shape = 'u8[1024]{0}', space=vmem, size = 0x400, scoped, tag = 'output window, operand 0, single buffered']
    %8 = vsyncpa [#allocation3], 0
    %9 = vsyncpa [#allocation6], 0
    %10 = vsyncpa [#allocation4], 0
    // Predicated region
    $region2: #{tpu_custom_call.1} parent=1 // pred_check
      _
    $region3: #{tpu_custom_call.1} parent=1 // pred_check_branch
      %12 = sbr.rel (0) target = $region5
    $region4: #{tpu_custom_call.1} parent=1 // pred_region
      %s14 = ssub.s32 16, 16
      %15 = vsyncadd [#allocation3], %s14
      %s17 = sshll.u32 [#allocation2], 4
      %s18 = int_to_ptr.vmem [resolvable:$true] %s17
      %20 = dma.hbm_to_vmem [thread:$0]  %s0, 16, %s18, [#allocation3]
    $region5: #{tpu_custom_call.1} parent=1 // pred_fallthru
      _
    // Predicated region
    $region6: #{tpu_custom_call.1} parent=1 // pred_check
      _
    $region7: #{tpu_custom_call.1} parent=1 // pred_check_branch
      %22 = sbr.rel (0) target = $region9
    $region8: #{tpu_custom_call.1} parent=1 // pred_region
      %s24 = ssub.s32 256, 256
      %25 = vsyncadd [#allocation6], %s24
      %s26 = sshll.u32 [#allocation5], 4
      %s27 = int_to_ptr.vmem [resolvable:$true] %s26
      %32 = dma.hbm_to_vmem [thread:$0]  %s1, 256, %s27, [#allocation6], 64, 64, 4
    $region9: #{tpu_custom_call.1} parent=1 // pred_fallthru
      _
    // Predicated region
    $region10: #{tpu_custom_call.1} parent=1 // pred_check
      _
    $region11: #{tpu_custom_call.1} parent=1 // pred_check_branch
      %34 = sbr.rel (0) target = $region13
    $region12: #{tpu_custom_call.1} parent=1 // pred_region
      %s36 = ssub.s32 16, 16
      %37 = vsyncadd [#allocation6], %s36
      %s39 = sshll.u32 [#allocation7], 4
      %s40 = int_to_ptr.vmem [resolvable:$true] %s39
      %42 = dma.hbm_to_vmem [thread:$0]  %s2, 16, %s40, [#allocation6]
    $region13: #{tpu_custom_call.1} parent=1 // pred_fallthru
      _
    // Predicated region
    $region14: #{tpu_custom_call.1} parent=1 // pred_check
      _
    $region15: #{tpu_custom_call.1} parent=1 // pred_check_branch
      %44 = sbr.rel (0) target = $region17
    $region16: #{tpu_custom_call.1} parent=1 // pred_region
      %45 = dma.done [#allocation3], 16
    $region17: #{tpu_custom_call.1} parent=1 // pred_fallthru
      _
    // Predicated region
    $region18: #{tpu_custom_call.1} parent=1 // pred_check
      _
    $region19: #{tpu_custom_call.1} parent=1 // pred_check_branch
      %47 = sbr.rel (0) target = $region21
    $region20: #{tpu_custom_call.1} parent=1 // pred_region
      %48 = dma.done [#allocation6], 256
    $region21: #{tpu_custom_call.1} parent=1 // pred_fallthru
      _
    // Predicated region
    $region22: #{tpu_custom_call.1} parent=1 // pred_check
      _
    $region23: #{tpu_custom_call.1} parent=1 // pred_check_branch
      %50 = sbr.rel (0) target = $region25
    $region24: #{tpu_custom_call.1} parent=1 // pred_region
      %51 = dma.done [#allocation6], 16
    $region25: #{tpu_custom_call.1} parent=1 // pred_fallthru
      _
    %v53 = vld [vmem:[#allocation2] sm:$0x1]
    %v54 = vld [vmem:[#allocation5] sm:$0xf]
    %v55 = vld [vmem:[#allocation5 + $0x4] sm:$0xf]
    %v56 = vld [vmem:[#allocation5 + $0x8] sm:$0xf]
    %v57 = vld [vmem:[#allocation5 + $0xc] sm:$0xf]
    %v58 = vld [vmem:[#allocation7] sm:$0x1]
    %v60 = vlaneseq
    %v61 = vshrl.u32 %v60, 7
    %v62 = vsub.s32 0, %v61
    %v63 = vrot.slane %v58, %v62
    %v69 = vunpack.c.l.b16 %v54
    %v70 = vunpack.c.l.b16 %v55
    %v71 = vunpack.c.l.b16 %v56
    %v72 = vunpack.c.l.b16 %v57
    %v73 = vpack.c.b16 %v70, %v69
    %v74 = vpack.c.b16 %v72, %v71
    %vm77 = vcmask 261120
    %v79 = vsel %vm77, %v53, 0
    %81 = vmatprep.subr.bf16.mxu0 0
    %82 = vmatpush1.bf16.msra.mxu0 %v73
    %83 = vmatprep.subr.bf16.mxu0 0
    %84 = vmatpush1.bf16.msra.mxu0 %v74
    %85 = vmatprep.subr.bf16.mxu0 0
    %86 = vmatpush1.bf16.msra.mxu0 0
    %87 = vmatprep.subr.bf16.mxu0 0
    %88 = vmatpush1.bf16.msra.mxu0 0
    %89 = vmatprep.subr.bf16.mxu0 0
    %90 = vmatpush1.bf16.msra.mxu0 0
    %91 = vmatprep.subr.bf16.mxu0 0
    %92 = vmatpush1.bf16.msra.mxu0 0
    %93 = vmatprep.subr.bf16.mxu0 0
    %94 = vmatpush1.bf16.msra.mxu0 0
    %95 = vmatprep.subr.bf16.mxu0 0
    %96 = vmatpush1.bf16.msra.mxu0 0
    %97 = vmatprep.subr.bf16.mxu0 0
    %98 = vmatpush1.bf16.msra.mxu0 0
    %99 = vmatprep.subr.bf16.mxu0 0
    %100 = vmatpush1.bf16.msra.mxu0 0
    %101 = vmatprep.subr.bf16.mxu0 0
    %102 = vmatpush1.bf16.msra.mxu0 0
    %103 = vmatprep.subr.bf16.mxu0 0
    %104 = vmatpush1.bf16.msra.mxu0 0
    %105 = vmatprep.subr.bf16.mxu0 0
    %106 = vmatpush1.bf16.msra.mxu0 0
    %107 = vmatprep.subr.bf16.mxu0 0
    %108 = vmatpush1.bf16.msra.mxu0 0
    %109 = vmatprep.subr.bf16.mxu0 0
    %110 = vmatpush1.bf16.msra.mxu0 0
    %111 = vmatprep.subr.bf16.mxu0 0
    %112 = vmatpush1.bf16.msra.mxu0 0
    %113 = vmatprep.mubr.bf16.mxu0 0
    %114 = vmatmul.mubr.bf16.gmra.mrb[0].mxu0 %v79
    %v115 = vpop.f32.mrb[0].mxu0
    %v116 = vadd.f32 %v63, %v115
    %v117 = vpop.f32.mrb[0].mxu0
    %v118 = vpop.f32.mrb[0].mxu0
    %v119 = vpop.f32.mrb[0].mxu0
    %120 = vdwg.mxu0
    %v121 = vtanh.pop %v116
    %vm122 = vcmask 254976
    %123 = vst.msk [vmem:[#allocation8] sm:$0x3] %vm122, %v121
    // Predicated region
    $region26: #{tpu_custom_call.1} parent=1 // pred_check
      _
    $region27: #{tpu_custom_call.1} parent=1 // pred_check_branch
      %125 = sbr.rel (0) target = $region29
    $region28: #{tpu_custom_call.1} parent=1 // pred_region
      %s127 = ssub.s32 32, 32
      %128 = vsyncadd [#allocation4], %s127
      %s130 = sshll.u32 [#allocation8], 4
      %s131 = int_to_ptr.vmem [resolvable:$true] %s130
      %133 = dma.vmem_to_hbm [thread:$0]  %s131, 32, %s3, [#allocation4]
    $region29: #{tpu_custom_call.1} parent=1 // pred_fallthru
      _
    // Predicated region
    $region30: #{tpu_custom_call.1} parent=1 // pred_check
      _
    $region31: #{tpu_custom_call.1} parent=1 // pred_check_branch
      %135 = sbr.rel (0) target = $region33
    $region32: #{tpu_custom_call.1} parent=1 // pred_region
      %136 = dma.done [#allocation4], 32
    $region33: #{tpu_custom_call.1} parent=1 // pred_fallthru
      _
    %137 = vsyncpa [#allocation3], 1
    %138 = vsyncpa [#allocation6], 1
    %139 = vsyncpa [#allocation4], 1

</llo_original>
